<compile_context>
chip_gen: v5e
topology: v5e:2x2
jax: 0.10.0
libtpu: 0.0.40
codegen_flags: <defaults>
</compile_context>

<pallas_src>
import functools

import jax
import jax.numpy as jnp
from jax import lax
from jax.experimental import pallas as pl
from jax.experimental.pallas import tpu as pltpu


# ----------------------------------------------------------------------------
# Fused OutputBlock kernel: causal conv + GLU + LayerNorm + fc1 + ReLU + fc2
# ----------------------------------------------------------------------------
def _output_block_kernel(x_ref, wc_ref, bc_ref, g_ref, bt_ref,
                         w1_ref, b1_ref, w2_ref, b2_ref, o_ref,
                         *, Ko, c0, V, eps):
    Bblk, Cin, TV = x_ref.shape
    N = Bblk * TV              # lane width of every stage
    G = N // V                 # number of LayerNorm groups (= Bblk * T)
    f32 = jnp.float32

    # -- 0) channel-major, lane-dense view of the input: (Cin, Bblk*T*V) -----
    x = x_ref[...]
    if Bblk > 1:
        xf = jnp.concatenate([x[b] for b in range(Bblk)], axis=-1)
    else:
        xf = x[0]                                             # (Cin, N)

    # lane position within each T*V group (causal mask for rolled taps);
    # built without integer div/mod: small iota tiled along lanes.
    pos = lax.broadcasted_iota(jnp.int32, (1, TV), 1)
    if Bblk > 1:
        pos = jnp.concatenate([pos] * Bblk, axis=-1)          # (1, N)

    # -- 1) causal (Ko,1) temporal conv: sum_k W_k @ shift_s(x), s = Ko-1-k --
    y = None
    for k in range(Ko):
        s = Ko - 1 - k                                        # time shift
        if s == 0:
            xs = xf
        else:
            rolled = pltpu.roll(xf, shift=s * V, axis=1)      # XLU lane rotate
            xs = jnp.where(pos >= s * V, rolled, 0.0)         # causal zeroing
        t = jnp.dot(wc_ref[k], xs, preferred_element_type=f32)
        y = t if y is None else y + t
    y = y + bc_ref[...]                                       # (2*c0, N)

    # -- GLU: p * sigmoid(q) --------------------------------------------------
    h = y[:c0, :] * jax.nn.sigmoid(y[c0:, :])                 # (c0, N)

    # -- 2) LayerNorm over [n_vertex, c0] per (b,t) — stays on (rows, N) ------
    # 0/1 selector matrices (no reshape of h): S groups lanes, St broadcasts.
    r = lax.broadcasted_iota(jnp.int32, (N, G), 0)
    cV = lax.broadcasted_iota(jnp.int32, (N, G), 1) * V
    S = ((r >= cV) & (r < cV + V)).astype(f32)                # (N, G)
    rV = lax.broadcasted_iota(jnp.int32, (G, N), 0) * V
    cc = lax.broadcasted_iota(jnp.int32, (G, N), 1)
    St = ((cc >= rV) & (cc < rV + V)).astype(f32)             # (G, N)
    ones_c0 = jnp.ones((c0, c0), f32)
    inv_n = 1.0 / (c0 * V)

    gmean = jnp.dot(ones_c0, jnp.dot(h, S, preferred_element_type=f32),
                    preferred_element_type=f32) * inv_n       # (c0, G)
    mu = jnp.dot(gmean, St, preferred_element_type=f32)       # (c0, N)
    d = h - mu
    gvar = jnp.dot(ones_c0, jnp.dot(d * d, S, preferred_element_type=f32),
                   preferred_element_type=f32) * inv_n        # (c0, G)
    rstd = lax.rsqrt(gvar + eps)                              # EUP, only c0*G
    hn = d * jnp.dot(rstd, St, preferred_element_type=f32)    # exact broadcast
    hn = hn * g_ref[...] + bt_ref[...]                        # lane-dense FMA

    # -- 3) fc1 + ReLU ---------------------------------------------------------
    z = jnp.maximum(jnp.dot(w1_ref[...], hn, preferred_element_type=f32)
                    + b1_ref[...], 0.0)                       # (c1, N)

    # -- 4) fc2 (output already channel-major == NCHW slab) --------------------
    o_ref[...] = jnp.dot(w2_ref[...], z,
                         preferred_element_type=f32) + b2_ref[...]


def output_block_forward(x_nchw, params, *, Ko, batch_block=None):
    """OutputBlock forward. x_nchw: (B, last_block_channel, T, n_vertex) NCHW.

    Parameter layout (how a real PyTorch port maps in):
      w_conv[o, k*Cin + c] = causal_conv.weight[o, c, k, 0]   shape (2*c0, Ko*Cin)
      b_conv               = causal_conv.bias                 shape (2*c0,)
      ln_g / ln_b           = tc1_ln.weight / .bias            shape (V, c0)
      w_fc1 / b_fc1         = fc1.weight / .bias               shape (c1, c0)/(c1,)
      w_fc2 / b_fc2         = fc2.weight / .bias               shape (cend, c1)/(cend,)

    batch_block: batch elements per grid step.  Default = whole batch in one
    step (best on single-TC v5e/v6e); use B//2 on v7x to feed both TCs.
    """
    B, Cin, T, V = x_nchw.shape
    TV = T * V
    wc, bc = params['w_conv'], params['b_conv']
    ln_g, ln_b = params['ln_g'], params['ln_b']
    w1, b1 = params['w_fc1'], params['b_fc1']
    w2, b2 = params['w_fc2'], params['b_fc2']

    two_c0 = wc.shape[0]
    c0 = two_c0 // 2
    c1 = w1.shape[0]
    cend = w2.shape[0]

    if batch_block is None:
        batch_block = B
    num_blocks = -(-B // batch_block)
    B_pad = num_blocks * batch_block
    N_blk = batch_block * TV

    x3 = x_nchw.reshape(B, Cin, TV)                         # free contiguous reshape
    if B_pad != B:
        x3 = jnp.pad(x3, ((0, B_pad - B), (0, 0), (0, 0)))  # tail-block padding

    # Weight re-packs (tiny, done once by XLA):
    wc_split = wc.reshape(two_c0, Ko, Cin).transpose(1, 0, 2)   # (Ko, 2c0, Cin)
    gamma_t = jnp.tile(ln_g.T, (1, batch_block * T))            # (c0, N_blk)
    beta_t = jnp.tile(ln_b.T, (1, batch_block * T))             # (c0, N_blk)

    kern = functools.partial(_output_block_kernel, Ko=Ko, c0=c0, V=V, eps=1e-12)
    out = pl.pallas_call(
        kern,
        out_shape=jax.ShapeDtypeStruct((cend, B_pad * TV), jnp.float32),
        grid=(num_blocks,),
        in_specs=[
            pl.BlockSpec((batch_block, Cin, TV), lambda i: (i, 0, 0)),  # x NCHW
            pl.BlockSpec((Ko, two_c0, Cin), lambda i: (0, 0, 0)),       # conv W
            pl.BlockSpec((two_c0, 1), lambda i: (0, 0)),                # conv b
            pl.BlockSpec((c0, N_blk), lambda i: (0, 0)),                # LN gamma
            pl.BlockSpec((c0, N_blk), lambda i: (0, 0)),                # LN beta
            pl.BlockSpec((c1, c0), lambda i: (0, 0)),                   # fc1 W
            pl.BlockSpec((c1, 1), lambda i: (0, 0)),                    # fc1 b
            pl.BlockSpec((cend, c1), lambda i: (0, 0)),                 # fc2 W
            pl.BlockSpec((cend, 1), lambda i: (0, 0)),                  # fc2 b
        ],
        out_specs=pl.BlockSpec((cend, N_blk), lambda i: (0, i)),        # lane-dense slab
        compiler_params=pltpu.CompilerParams(
            dimension_semantics=("parallel",)),
    )(x3, wc_split, bc.reshape(-1, 1), gamma_t, beta_t,
      w1, b1.reshape(-1, 1), w2, b2.reshape(-1, 1))

    out = out[:, :B * TV]
    # (cend, B*T*V) -> (B, cend, T, V); free when cend == 1.
    return jnp.transpose(out.reshape(cend, B, T, V), (1, 0, 2, 3))


# ----------------------------------------------------------------------------
# Pure-JAX reference (mirrors the PyTorch forward) for a correctness check.
# ----------------------------------------------------------------------------
def _reference_output_block(x_nchw, params, Ko):
    B, Cin, T, V = x_nchw.shape
    wc, bc = params['w_conv'], params['b_conv']
    two_c0 = wc.shape[0]
    c0 = two_c0 // 2
    xpad = jnp.pad(x_nchw, ((0, 0), (0, 0), (Ko - 1, 0), (0, 0)))  # causal pad
    y = jnp.zeros((B, two_c0, T, V), jnp.float32)
    for k in range(Ko):
        wk = wc[:, k * Cin:(k + 1) * Cin]
        y = y + jnp.einsum('oc,bctv->botv', wk, xpad[:, :, k:k + T, :])
    y = y + bc[None, :, None, None]
    h = y[:, :c0] * jax.nn.sigmoid(y[:, c0:])                      # GLU
    h = jnp.transpose(h, (0, 2, 3, 1))                             # (B, T, V, c0)
    mu = jnp.mean(h, axis=(2, 3), keepdims=True)
    var = jnp.mean(jnp.square(h - mu), axis=(2, 3), keepdims=True)
    hn = (h - mu) / jnp.sqrt(var + 1e-12) * params['ln_g'] + params['ln_b']
    z = jnp.maximum(hn @ params['w_fc1'].T + params['b_fc1'], 0.0)
    o = z @ params['w_fc2'].T + params['b_fc2']                    # (B, T, V, cend)
    return jnp.transpose(o, (0, 3, 1, 2))


# ----------------------------------------------------------------------------
if __name__ == "__main__":
    # NCHW input: (batch, last_block_channel, time, n_vertex); T*V = 128 lanes.
    B, Cin, T, V = 2, 4, 8, 16
    Ko = 3
    c0, c1, cend = 16, 16, 1          # channels = [16, 16], end_channel = 1

    key = jax.random.PRNGKey(0)
    ks = jax.random.split(key, 9)
    s = 0.1
    params = {
        'w_conv': jax.random.normal(ks[0], (2 * c0, Ko * Cin), jnp.float32) * s,
        'b_conv': jax.random.normal(ks[1], (2 * c0,), jnp.float32) * s,
        'ln_g': 1.0 + jax.random.normal(ks[2], (V, c0), jnp.float32) * s,
        'ln_b': jax.random.normal(ks[3], (V, c0), jnp.float32) * s,
        'w_fc1': jax.random.normal(ks[4], (c1, c0), jnp.float32) * s,
        'b_fc1': jax.random.normal(ks[5], (c1,), jnp.float32) * s,
        'w_fc2': jax.random.normal(ks[6], (cend, c1), jnp.float32) * s,
        'b_fc2': jax.random.normal(ks[7], (cend,), jnp.float32) * s,
    }
    x = jax.random.normal(ks[8], (B, Cin, T, V), jnp.float32)

    out = output_block_forward(x, params, Ko=Ko)     # whole batch, grid=(1,)
    out = jax.block_until_ready(out)
    assert out.shape == (B, cend, T, V), out.shape
    assert bool(jnp.all(jnp.isfinite(out)))

    ref = _reference_output_block(x, params, Ko)
    max_err = float(jnp.max(jnp.abs(out - ref)))
    assert bool(jnp.allclose(out, ref, rtol=1e-4, atol=1e-4)), max_err
    print("KERNEL_OK")
</pallas_src>

<mosaic_0001>
module attributes {stable_mosaic.version = 11 : i64} {
  func.func @_output_block_kernel(%arg0: i32, %arg1: memref<2x4x128xf32, #tpu.memory_space<vmem>>, %arg2: memref<3x32x4xf32, #tpu.memory_space<vmem>>, %arg3: memref<32x1xf32, #tpu.memory_space<vmem>>, %arg4: memref<16x256xf32, #tpu.memory_space<vmem>>, %arg5: memref<16x256xf32, #tpu.memory_space<vmem>>, %arg6: memref<16x16xf32, #tpu.memory_space<vmem>>, %arg7: memref<16x1xf32, #tpu.memory_space<vmem>>, %arg8: memref<1x16xf32, #tpu.memory_space<vmem>>, %arg9: memref<1x1xf32, #tpu.memory_space<vmem>>, %arg10: memref<1x256xf32, #tpu.memory_space<vmem>>) attributes {dimension_semantics = [#tpu.dimension_semantics<parallel>], iteration_bounds = array<i64: 1>, scalar_prefetch = 0 : i64, scratch_operands = 0 : i64, tpu.core_type = #tpu.core_type<tc>, window_params = [{transform_indices = @transform_0, window_bounds = array<i64: 2, 4, 128>}, {pipeline_mode = #tpu.pipeline_mode<synchronous>, transform_indices = @transform_1, window_bounds = array<i64: 3, 32, 4>}, {pipeline_mode = #tpu.pipeline_mode<synchronous>, transform_indices = @transform_2, window_bounds = array<i64: 32, 1>}, {pipeline_mode = #tpu.pipeline_mode<synchronous>, transform_indices = @transform_3, window_bounds = array<i64: 16, 256>}, {pipeline_mode = #tpu.pipeline_mode<synchronous>, transform_indices = @transform_4, window_bounds = array<i64: 16, 256>}, {pipeline_mode = #tpu.pipeline_mode<synchronous>, transform_indices = @transform_5, window_bounds = array<i64: 16, 16>}, {pipeline_mode = #tpu.pipeline_mode<synchronous>, transform_indices = @transform_6, window_bounds = array<i64: 16, 1>}, {pipeline_mode = #tpu.pipeline_mode<synchronous>, transform_indices = @transform_7, window_bounds = array<i64: 1, 16>}, {pipeline_mode = #tpu.pipeline_mode<synchronous>, transform_indices = @transform_8, window_bounds = array<i64: 1, 1>}, {transform_indices = @transform_9, window_bounds = array<i64: 1, 256>}]} {
    %c0 = arith.constant 0 : index
    %c0_0 = arith.constant 0 : index
    %c0_1 = arith.constant 0 : index
    %0 = vector.load %arg1[%c0, %c0_0, %c0_1] : memref<2x4x128xf32, #tpu.memory_space<vmem>>, vector<2x4x128xf32>
    %1 = vector.extract_strided_slice %0 {offsets = [0, 0, 0], sizes = [1, 4, 128], strides = [1, 1, 1]} : vector<2x4x128xf32> to vector<1x4x128xf32>
    %2 = vector.shape_cast %1 : vector<1x4x128xf32> to vector<4x128xf32>
    %3 = vector.extract_strided_slice %0 {offsets = [1, 0, 0], sizes = [1, 4, 128], strides = [1, 1, 1]} : vector<2x4x128xf32> to vector<1x4x128xf32>
    %4 = vector.shape_cast %3 : vector<1x4x128xf32> to vector<4x128xf32>
    %5 = tpu.concatenate %2, %4 in 1 : vector<4x128xf32>, vector<4x128xf32> -> vector<4x256xf32>
    %6 = tpu.iota {dimensions = array<i32: 1>} : vector<1x128xi32>
    %7 = tpu.concatenate %6, %6 in 1 : vector<1x128xi32>, vector<1x128xi32> -> vector<1x256xi32>
    %c32_i32 = arith.constant 32 : i32
    %8 = tpu.dynamic_rotate %5 by %c32_i32 dim 1 : vector<4x256xf32>, i32 -> vector<4x256xf32>
    %c32_i32_2 = arith.constant 32 : i32
    %9 = vector.broadcast %c32_i32_2 : i32 to vector<1x256xi32>
    %10 = arith.cmpi sge, %7, %9 : vector<1x256xi32>
    %cst = arith.constant 0.000000e+00 : f32
    %11 = vector.shape_cast %10 : vector<1x256xi1> to vector<1x256xi1>
    %12 = vector.broadcast %11 : vector<1x256xi1> to vector<4x256xi1>
    %13 = vector.broadcast %cst : f32 to vector<4x256xf32>
    %14 = arith.select %12, %8, %13 : vector<4x256xi1>, vector<4x256xf32>
    %c0_3 = arith.constant 0 : index
    %c0_4 = arith.constant 0 : index
    %c0_5 = arith.constant 0 : index
    %15 = vector.load %arg2[%c0_3, %c0_4, %c0_5] : memref<3x32x4xf32, #tpu.memory_space<vmem>>, vector<1x32x4xf32>
    %16 = vector.shape_cast %15 : vector<1x32x4xf32> to vector<32x4xf32>
    %cst_6 = arith.constant dense<0.000000e+00> : vector<32x256xf32>
    %17 = tpu.matmul %16, %14, %cst_6 {dimension_numbers = #tpu.dot_dimension_numbers<[1], [0], [0], [1], [0, 0, 1, 1], [], []>} : vector<32x4xf32>, vector<4x256xf32>, vector<32x256xf32> -> vector<32x256xf32>
    %c16_i32 = arith.constant 16 : i32
    %18 = tpu.dynamic_rotate %5 by %c16_i32 dim 1 : vector<4x256xf32>, i32 -> vector<4x256xf32>
    %c16_i32_7 = arith.constant 16 : i32
    %19 = vector.broadcast %c16_i32_7 : i32 to vector<1x256xi32>
    %20 = arith.cmpi sge, %7, %19 : vector<1x256xi32>
    %cst_8 = arith.constant 0.000000e+00 : f32
    %21 = vector.shape_cast %20 : vector<1x256xi1> to vector<1x256xi1>
    %22 = vector.broadcast %21 : vector<1x256xi1> to vector<4x256xi1>
    %23 = vector.broadcast %cst_8 : f32 to vector<4x256xf32>
    %24 = arith.select %22, %18, %23 : vector<4x256xi1>, vector<4x256xf32>
    %c1 = arith.constant 1 : index
    %c0_9 = arith.constant 0 : index
    %c0_10 = arith.constant 0 : index
    %25 = vector.load %arg2[%c1, %c0_9, %c0_10] : memref<3x32x4xf32, #tpu.memory_space<vmem>>, vector<1x32x4xf32>
    %26 = vector.shape_cast %25 : vector<1x32x4xf32> to vector<32x4xf32>
    %cst_11 = arith.constant dense<0.000000e+00> : vector<32x256xf32>
    %27 = tpu.matmul %26, %24, %cst_11 {dimension_numbers = #tpu.dot_dimension_numbers<[1], [0], [0], [1], [0, 0, 1, 1], [], []>} : vector<32x4xf32>, vector<4x256xf32>, vector<32x256xf32> -> vector<32x256xf32>
    %28 = arith.addf %17, %27 : vector<32x256xf32>
    %c2 = arith.constant 2 : index
    %c0_12 = arith.constant 0 : index
    %c0_13 = arith.constant 0 : index
    %29 = vector.load %arg2[%c2, %c0_12, %c0_13] : memref<3x32x4xf32, #tpu.memory_space<vmem>>, vector<1x32x4xf32>
    %30 = vector.shape_cast %29 : vector<1x32x4xf32> to vector<32x4xf32>
    %cst_14 = arith.constant dense<0.000000e+00> : vector<32x256xf32>
    %31 = tpu.matmul %30, %5, %cst_14 {dimension_numbers = #tpu.dot_dimension_numbers<[1], [0], [0], [1], [0, 0, 1, 1], [], []>} : vector<32x4xf32>, vector<4x256xf32>, vector<32x256xf32> -> vector<32x256xf32>
    %32 = arith.addf %28, %31 : vector<32x256xf32>
    %c0_15 = arith.constant 0 : index
    %c0_16 = arith.constant 0 : index
    %33 = vector.load %arg3[%c0_15, %c0_16] : memref<32x1xf32, #tpu.memory_space<vmem>>, vector<32x1xf32>
    %34 = vector.broadcast %33 : vector<32x1xf32> to vector<32x256xf32>
    %35 = arith.addf %32, %34 : vector<32x256xf32>
    %36 = vector.extract_strided_slice %35 {offsets = [0, 0], sizes = [16, 256], strides = [1, 1]} : vector<32x256xf32> to vector<16x256xf32>
    %37 = vector.extract_strided_slice %35 {offsets = [16, 0], sizes = [16, 256], strides = [1, 1]} : vector<32x256xf32> to vector<16x256xf32>
    %38 = arith.negf %37 : vector<16x256xf32>
    %39 = math.exp %38 : vector<16x256xf32>
    %cst_17 = arith.constant 1.000000e+00 : f32
    %40 = vector.broadcast %cst_17 : f32 to vector<16x256xf32>
    %41 = arith.addf %40, %39 : vector<16x256xf32>
    %42 = arith.divf %40, %41 : vector<16x256xf32>
    %43 = arith.mulf %36, %42 : vector<16x256xf32>
    %44 = tpu.iota {dimensions = array<i32: 0>} : vector<256x16xi32>
    %45 = tpu.iota {dimensions = array<i32: 1>} : vector<256x16xi32>
    %c16_i32_18 = arith.constant 16 : i32
    %46 = vector.broadcast %c16_i32_18 : i32 to vector<256x16xi32>
    %47 = arith.muli %45, %46 : vector<256x16xi32>
    %48 = arith.cmpi sge, %44, %47 : vector<256x16xi32>
    %c16_i32_19 = arith.constant 16 : i32
    %49 = vector.broadcast %c16_i32_19 : i32 to vector<256x16xi32>
    %50 = arith.addi %47, %49 : vector<256x16xi32>
    %51 = arith.cmpi slt, %44, %50 : vector<256x16xi32>
    %52 = arith.andi %48, %51 : vector<256x16xi1>
    %53 = arith.extui %52 : vector<256x16xi1> to vector<256x16xi32>
    %54 = arith.sitofp %53 : vector<256x16xi32> to vector<256x16xf32>
    %55 = tpu.iota {dimensions = array<i32: 0>} : vector<16x256xi32>
    %c16_i32_20 = arith.constant 16 : i32
    %56 = vector.broadcast %c16_i32_20 : i32 to vector<16x256xi32>
    %57 = arith.muli %55, %56 : vector<16x256xi32>
    %58 = tpu.iota {dimensions = array<i32: 1>} : vector<16x256xi32>
    %59 = arith.cmpi sge, %58, %57 : vector<16x256xi32>
    %c16_i32_21 = arith.constant 16 : i32
    %60 = vector.broadcast %c16_i32_21 : i32 to vector<16x256xi32>
    %61 = arith.addi %57, %60 : vector<16x256xi32>
    %62 = arith.cmpi slt, %58, %61 : vector<16x256xi32>
    %63 = arith.andi %59, %62 : vector<16x256xi1>
    %64 = arith.extui %63 : vector<16x256xi1> to vector<16x256xi32>
    %65 = arith.sitofp %64 : vector<16x256xi32> to vector<16x256xf32>
    %cst_22 = arith.constant 1.000000e+00 : f32
    %66 = vector.broadcast %cst_22 : f32 to vector<16x16xf32>
    %cst_23 = arith.constant dense<0.000000e+00> : vector<16x16xf32>
    %67 = tpu.matmul %43, %54, %cst_23 {dimension_numbers = #tpu.dot_dimension_numbers<[1], [0], [0], [1], [0, 0, 1, 1], [], []>} : vector<16x256xf32>, vector<256x16xf32>, vector<16x16xf32> -> vector<16x16xf32>
    %cst_24 = arith.constant dense<0.000000e+00> : vector<16x16xf32>
    %68 = tpu.matmul %66, %67, %cst_24 {dimension_numbers = #tpu.dot_dimension_numbers<[1], [0], [0], [1], [0, 0, 1, 1], [], []>} : vector<16x16xf32>, vector<16x16xf32>, vector<16x16xf32> -> vector<16x16xf32>
    %cst_25 = arith.constant 3.906250e-03 : f32
    %69 = vector.broadcast %cst_25 : f32 to vector<16x16xf32>
    %70 = arith.mulf %68, %69 : vector<16x16xf32>
    %cst_26 = arith.constant dense<0.000000e+00> : vector<16x256xf32>
    %71 = tpu.matmul %70, %65, %cst_26 {dimension_numbers = #tpu.dot_dimension_numbers<[1], [0], [0], [1], [0, 0, 1, 1], [], []>} : vector<16x16xf32>, vector<16x256xf32>, vector<16x256xf32> -> vector<16x256xf32>
    %72 = arith.subf %43, %71 : vector<16x256xf32>
    %73 = arith.mulf %72, %72 : vector<16x256xf32>
    %cst_27 = arith.constant dense<0.000000e+00> : vector<16x16xf32>
    %74 = tpu.matmul %73, %54, %cst_27 {dimension_numbers = #tpu.dot_dimension_numbers<[1], [0], [0], [1], [0, 0, 1, 1], [], []>} : vector<16x256xf32>, vector<256x16xf32>, vector<16x16xf32> -> vector<16x16xf32>
    %cst_28 = arith.constant dense<0.000000e+00> : vector<16x16xf32>
    %75 = tpu.matmul %66, %74, %cst_28 {dimension_numbers = #tpu.dot_dimension_numbers<[1], [0], [0], [1], [0, 0, 1, 1], [], []>} : vector<16x16xf32>, vector<16x16xf32>, vector<16x16xf32> -> vector<16x16xf32>
    %cst_29 = arith.constant 3.906250e-03 : f32
    %76 = vector.broadcast %cst_29 : f32 to vector<16x16xf32>
    %77 = arith.mulf %75, %76 : vector<16x16xf32>
    %cst_30 = arith.constant 9.99999996E-13 : f32
    %78 = vector.broadcast %cst_30 : f32 to vector<16x16xf32>
    %79 = arith.addf %77, %78 : vector<16x16xf32>
    %80 = math.rsqrt %79 : vector<16x16xf32>
    %cst_31 = arith.constant dense<0.000000e+00> : vector<16x256xf32>
    %81 = tpu.matmul %80, %65, %cst_31 {dimension_numbers = #tpu.dot_dimension_numbers<[1], [0], [0], [1], [0, 0, 1, 1], [], []>} : vector<16x16xf32>, vector<16x256xf32>, vector<16x256xf32> -> vector<16x256xf32>
    %82 = arith.mulf %72, %81 : vector<16x256xf32>
    %c0_32 = arith.constant 0 : index
    %c0_33 = arith.constant 0 : index
    %83 = vector.load %arg4[%c0_32, %c0_33] : memref<16x256xf32, #tpu.memory_space<vmem>>, vector<16x256xf32>
    %84 = arith.mulf %82, %83 : vector<16x256xf32>
    %c0_34 = arith.constant 0 : index
    %c0_35 = arith.constant 0 : index
    %85 = vector.load %arg5[%c0_34, %c0_35] : memref<16x256xf32, #tpu.memory_space<vmem>>, vector<16x256xf32>
    %86 = arith.addf %84, %85 : vector<16x256xf32>
    %c0_36 = arith.constant 0 : index
    %c0_37 = arith.constant 0 : index
    %87 = vector.load %arg6[%c0_36, %c0_37] : memref<16x16xf32, #tpu.memory_space<vmem>>, vector<16x16xf32>
    %cst_38 = arith.constant dense<0.000000e+00> : vector<16x256xf32>
    %88 = tpu.matmul %87, %86, %cst_38 {dimension_numbers = #tpu.dot_dimension_numbers<[1], [0], [0], [1], [0, 0, 1, 1], [], []>} : vector<16x16xf32>, vector<16x256xf32>, vector<16x256xf32> -> vector<16x256xf32>
    %c0_39 = arith.constant 0 : index
    %c0_40 = arith.constant 0 : index
    %89 = vector.load %arg7[%c0_39, %c0_40] : memref<16x1xf32, #tpu.memory_space<vmem>>, vector<16x1xf32>
    %90 = vector.broadcast %89 : vector<16x1xf32> to vector<16x256xf32>
    %91 = arith.addf %88, %90 : vector<16x256xf32>
    %cst_41 = arith.constant 0.000000e+00 : f32
    %92 = vector.broadcast %cst_41 : f32 to vector<16x256xf32>
    %93 = arith.maximumf %91, %92 : vector<16x256xf32>
    %c0_42 = arith.constant 0 : index
    %c0_43 = arith.constant 0 : index
    %94 = vector.load %arg8[%c0_42, %c0_43] : memref<1x16xf32, #tpu.memory_space<vmem>>, vector<1x16xf32>
    %cst_44 = arith.constant dense<0.000000e+00> : vector<1x256xf32>
    %95 = tpu.matmul %94, %93, %cst_44 {dimension_numbers = #tpu.dot_dimension_numbers<[1], [0], [0], [1], [0, 0, 1, 1], [], []>} : vector<1x16xf32>, vector<16x256xf32>, vector<1x256xf32> -> vector<1x256xf32>
    %c0_45 = arith.constant 0 : index
    %c0_46 = arith.constant 0 : index
    %96 = vector.load %arg9[%c0_45, %c0_46] : memref<1x1xf32, #tpu.memory_space<vmem>>, vector<1x1xf32>
    %97 = vector.broadcast %96 : vector<1x1xf32> to vector<1x256xf32>
    %98 = arith.addf %95, %97 : vector<1x256xf32>
    %c0_47 = arith.constant 0 : index
    %c0_48 = arith.constant 0 : index
    %99 = vector.load %arg10[%c0_47, %c0_48] : memref<1x256xf32, #tpu.memory_space<vmem>>, vector<1x256xf32>
    tpu.vector_store %arg10[%c0_47, %c0_48], %98 {strides = array<i32>} : memref<1x256xf32, #tpu.memory_space<vmem>>, vector<1x256xf32>,
    return
  }
  func.func @transform_0(%arg0: i32) -> (i32, i32, i32) {
    %c0_i32 = arith.constant 0 : i32
    %c0_i32_0 = arith.constant 0 : i32
    %c0_i32_1 = arith.constant 0 : i32
    return %arg0, %c0_i32, %c0_i32_0 : i32, i32, i32
  }
  func.func @transform_1(%arg0: i32) -> (i32, i32, i32) {
    %c0_i32 = arith.constant 0 : i32
    %c0_i32_0 = arith.constant 0 : i32
    %c0_i32_1 = arith.constant 0 : i32
    %c0_i32_2 = arith.constant 0 : i32
    return %c0_i32, %c0_i32_0, %c0_i32_1 : i32, i32, i32
  }
  func.func @transform_2(%arg0: i32) -> (i32, i32) {
    %c0_i32 = arith.constant 0 : i32
    %c0_i32_0 = arith.constant 0 : i32
    %c0_i32_1 = arith.constant 0 : i32
    return %c0_i32, %c0_i32_0 : i32, i32
  }
  func.func @transform_3(%arg0: i32) -> (i32, i32) {
    %c0_i32 = arith.constant 0 : i32
    %c0_i32_0 = arith.constant 0 : i32
    %c0_i32_1 = arith.constant 0 : i32
    return %c0_i32, %c0_i32_0 : i32, i32
  }
  func.func @transform_4(%arg0: i32) -> (i32, i32) {
    %c0_i32 = arith.constant 0 : i32
    %c0_i32_0 = arith.constant 0 : i32
    %c0_i32_1 = arith.constant 0 : i32
    return %c0_i32, %c0_i32_0 : i32, i32
  }
  func.func @transform_5(%arg0: i32) -> (i32, i32) {
    %c0_i32 = arith.constant 0 : i32
    %c0_i32_0 = arith.constant 0 : i32
    %c0_i32_1 = arith.constant 0 : i32
    return %c0_i32, %c0_i32_0 : i32, i32
  }
  func.func @transform_6(%arg0: i32) -> (i32, i32) {
    %c0_i32 = arith.constant 0 : i32
    %c0_i32_0 = arith.constant 0 : i32
    %c0_i32_1 = arith.constant 0 : i32
    return %c0_i32, %c0_i32_0 : i32, i32
  }
  func.func @transform_7(%arg0: i32) -> (i32, i32) {
    %c0_i32 = arith.constant 0 : i32
    %c0_i32_0 = arith.constant 0 : i32
    %c0_i32_1 = arith.constant 0 : i32
    return %c0_i32, %c0_i32_0 : i32, i32
  }
  func.func @transform_8(%arg0: i32) -> (i32, i32) {
    %c0_i32 = arith.constant 0 : i32
    %c0_i32_0 = arith.constant 0 : i32
    %c0_i32_1 = arith.constant 0 : i32
    return %c0_i32, %c0_i32_0 : i32, i32
  }
  func.func @transform_9(%arg0: i32) -> (i32, i32) {
    %c0_i32 = arith.constant 0 : i32
    %c0_i32_0 = arith.constant 0 : i32
    return %c0_i32, %arg0 : i32, i32
  }
}

</mosaic_0001>

<llo_original>
// kernel: tpu_custom_call.1
$region0: #{tpu_custom_call.1}
  #allocation0 [shape = 'u32[]', space=smem, size = 0x4, offset = 0x4, fixed_abs, tag = 'smem constant byte address 0x4 - core index']
  #allocation1 [shape = 'u32[72,128]{1,0:T(1,128)}', space=vmem, size = 0x9000, scoped, tag = 'internal scratch']
  #allocation2 [shape = 'f32[1,1]{1,0:T(1,128)S(1)}', space=vmem, size = 0x200, scoped, tag = 'scoped memory for tpu_custom_call.1']
  %s0 = inlined_call_operand.vmem [shape: f32[2,4,128], index: 0, kind: input, shape index: {}]
  %s1 = inlined_call_operand.vmem [shape: f32[3,32,4], index: 1, kind: input, shape index: {}]
  %s2 = inlined_call_operand.vmem [shape: f32[32,1], index: 2, kind: input, shape index: {}]
  %s3 = inlined_call_operand.vmem [shape: f32[16,256], index: 3, kind: input, shape index: {}]
  %s4 = inlined_call_operand.vmem [shape: f32[16,256], index: 4, kind: input, shape index: {}]
  %s5 = inlined_call_operand.vmem [shape: f32[16,16], index: 5, kind: input, shape index: {}]
  %s6 = inlined_call_operand.vmem [shape: f32[16,1], index: 6, kind: input, shape index: {}]
  %s7 = inlined_call_operand.vmem [shape: f32[1,16], index: 7, kind: input, shape index: {}]
  %s8 = inlined_call_operand.<no memory space> [shape: f32[1,1], index: 8, kind: input, shape index: {}]
  %s9 = inlined_call_operand.hbm [shape: f32[1,256], index: 9, kind: output, shape index: {}]
  %s10 = sld [smem:[#allocation0]]
  $region46: #{tpu_custom_call.1} parent=0
    _
  %s12 = ssub.s32 1, %s10
  %s13 = scalar_select 0, %s12, %s10
  %v14 = vstv %s8
  %15 = vst [vmem:[#allocation2] sm:$0x1] %v14
  $region1: #{tpu_custom_call.1} parent=0
    #allocation3 [shape = 'u8[1024]{0}', space=vmem, size = 0x400, scoped, tag = 'output window, operand 0, single buffered']
    #allocation4 [shape = 's32[1]{0}', space=sflag, size = 0x4, scoped, tag = 'scoped memory for tpu_custom_call.1']
    %16 = vsyncpa [#allocation4], 0
    // Predicated region
    $region2: #{tpu_custom_call.1} parent=1 // pred_check
      _
    $region3: #{tpu_custom_call.1} parent=1 // pred_check_branch
      %18 = sbr.rel (0) target = $region5
    $region4: #{tpu_custom_call.1} parent=1 // pred_region
      _
    $region5: #{tpu_custom_call.1} parent=1 // pred_fallthru
      _
    // Predicated region
    $region6: #{tpu_custom_call.1} parent=1 // pred_check
      _
    $region7: #{tpu_custom_call.1} parent=1 // pred_check_branch
      %20 = sbr.rel (0) target = $region9
    $region8: #{tpu_custom_call.1} parent=1 // pred_region
      _
    $region9: #{tpu_custom_call.1} parent=1 // pred_fallthru
      _
    // Predicated region
    $region10: #{tpu_custom_call.1} parent=1 // pred_check
      _
    $region11: #{tpu_custom_call.1} parent=1 // pred_check_branch
      %22 = sbr.rel (0) target = $region13
    $region12: #{tpu_custom_call.1} parent=1 // pred_region
      _
    $region13: #{tpu_custom_call.1} parent=1 // pred_fallthru
      _
    // Predicated region
    $region14: #{tpu_custom_call.1} parent=1 // pred_check
      _
    $region15: #{tpu_custom_call.1} parent=1 // pred_check_branch
      %24 = sbr.rel (0) target = $region17
    $region16: #{tpu_custom_call.1} parent=1 // pred_region
      _
    $region17: #{tpu_custom_call.1} parent=1 // pred_fallthru
      _
    // Predicated region
    $region18: #{tpu_custom_call.1} parent=1 // pred_check
      _
    $region19: #{tpu_custom_call.1} parent=1 // pred_check_branch
      %26 = sbr.rel (0) target = $region21
    $region20: #{tpu_custom_call.1} parent=1 // pred_region
      _
    $region21: #{tpu_custom_call.1} parent=1 // pred_fallthru
      _
    // Predicated region
    $region22: #{tpu_custom_call.1} parent=1 // pred_check
      _
    $region23: #{tpu_custom_call.1} parent=1 // pred_check_branch
      %28 = sbr.rel (0) target = $region25
    $region24: #{tpu_custom_call.1} parent=1 // pred_region
      _
    $region25: #{tpu_custom_call.1} parent=1 // pred_fallthru
      _
    // Predicated region
    $region26: #{tpu_custom_call.1} parent=1 // pred_check
      _
    $region27: #{tpu_custom_call.1} parent=1 // pred_check_branch
      %30 = sbr.rel (0) target = $region29
    $region28: #{tpu_custom_call.1} parent=1 // pred_region
      _
    $region29: #{tpu_custom_call.1} parent=1 // pred_fallthru
      _
    // Predicated region
    $region30: #{tpu_custom_call.1} parent=1 // pred_check
      _
    $region31: #{tpu_custom_call.1} parent=1 // pred_check_branch
      %32 = sbr.rel (0) target = $region33
    $region32: #{tpu_custom_call.1} parent=1 // pred_region
      _
    $region33: #{tpu_custom_call.1} parent=1 // pred_fallthru
      _
    // Predicated region
    $region34: #{tpu_custom_call.1} parent=1 // pred_check
      _
    $region35: #{tpu_custom_call.1} parent=1 // pred_check_branch
      %34 = sbr.rel (0) target = $region37
    $region36: #{tpu_custom_call.1} parent=1 // pred_region
      _
    $region37: #{tpu_custom_call.1} parent=1 // pred_fallthru
      _
    %v35 = vld [vmem:[%s0] sm:$0xf]
    %v36 = vld [vmem:[%s0 + $0x4] sm:$0xf]
    %v37 = vlaneseq
    %v38 = vand.u32 %v37, 127
    %39 = vrot.lane.b32.xlu0 %v35, 32
    %v40 = vpop.permute.xlu0 %39
    %41 = vrot.lane.b32.xlu0 %v36, 32
    %v42 = vpop.permute.xlu0 %41
    %vm43 = vcmp.lt.s32.totalorder %v38, 32
    %v44 = vsel %vm43, %v40, %v42
    %v45 = vsel %vm43, %v42, %v40
    %vm46 = vcmp.ge.s32.totalorder %v38, 32
    %v47 = vsel %vm46, 1, 0
    %v48 = vperm.slane %v47, 0
    %vm49 = vcmp.eq.s32.totalorder %v48, 1
    %v50 = vsel %vm49, %v45, 0.0
    %v51 = vsel %vm49, %v44, 0.0
    %v52 = vld [vmem:[%s1] sm:$0xff]
    %v53 = vld [vmem:[%s1 + $0x8] sm:$0xff]
    %v54 = vld [vmem:[%s1 + $0x10] sm:$0xff]
    %v55 = vld [vmem:[%s1 + $0x18] sm:$0xff]
    %56 = vrot.lane.b32.xlu0 %v35, 16
    %v57 = vpop.permute.xlu0 %56
    %58 = vrot.lane.b32.xlu0 %v36, 16
    %v59 = vpop.permute.xlu0 %58
    %vm60 = vcmp.lt.s32.totalorder %v38, 16
    %v61 = vsel %vm60, %v57, %v59
    %v62 = vsel %vm60, %v59, %v57
    %vm63 = vcmp.ge.s32.totalorder %v38, 16
    %v64 = vsel %vm63, 1, 0
    %v65 = vperm.slane %v64, 0
    %vm66 = vcmp.eq.s32.totalorder %v65, 1
    %v67 = vsel %vm66, %v62, 0.0
    %v68 = vsel %vm66, %v61, 0.0
    %s69 = scalar_lea.vmem %s1, 32
    %v70 = vld [vmem:[%s69] sm:$0xff]
    %v71 = vld [vmem:[%s69 + $0x8] sm:$0xff]
    %v72 = vld [vmem:[%s69 + $0x10] sm:$0xff]
    %v73 = vld [vmem:[%s69 + $0x18] sm:$0xff]
    %vm74 = vcmask 31744
    %v76 = vsel %vm74, %v70, 0
    %v79 = vsel %vm74, %v71, 0
    %v82 = vsel %vm74, %v72, 0
    %v85 = vsel %vm74, %v73, 0
    %vm87 = vcmask 1043456
    %v89 = vsel %vm87, %v67, 0
    %v92 = vsel %vm87, %v68, 0
    %94 = vmatpush.msra.mxu0 0.0
    %95 = vmatpush.msra.mxu0 0.0
    %96 = vmatpush.msra.mxu0 0.0
    %97 = vmatpush.msra.mxu0 0.0
    %98 = vmatpush.msra.mxu0 0.0
    %99 = vmatpush.msra.mxu0 0.0
    %100 = vmatpush.msra.mxu0 0.0
    %101 = vmatpush.msra.mxu0 0.0
    %102 = vmatpush.msra.mxu0 0.0
    %103 = vmatpush.msra.mxu0 0.0
    %104 = vmatpush.msra.mxu0 0.0
    %105 = vmatpush.msra.mxu0 0.0
    %106 = vmatpush.msra.mxu0 0.0
    %107 = vmatpush.msra.mxu0 0.0
    %108 = vmatpush.msra.mxu0 0.0
    %109 = vmatpush.msra.mxu0 %v89
    %110 = vmatmul.f32.gmra.mxu0 %v76
    %v111 = vpop.f32.mrf.mxu0
    %v112 = vadd.f32 0.0, %v111
    %113 = vmatmul.f32.gmra.mxu0 %v79
    %v114 = vpop.f32.mrf.mxu0
    %v115 = vadd.f32 0.0, %v114
    %116 = vmatmul.f32.gmra.mxu0 %v82
    %v117 = vpop.f32.mrf.mxu0
    %v118 = vadd.f32 0.0, %v117
    %119 = vmatmul.f32.gmra.mxu0 %v85
    %v120 = vpop.f32.mrf.mxu0
    %v121 = vadd.f32 0.0, %v120
    %122 = vdwg.mxu0
    %123 = vmatpush.msra.mxu0 0.0
    %124 = vmatpush.msra.mxu0 0.0
    %125 = vmatpush.msra.mxu0 0.0
    %126 = vmatpush.msra.mxu0 0.0
    %127 = vmatpush.msra.mxu0 0.0
    %128 = vmatpush.msra.mxu0 0.0
    %129 = vmatpush.msra.mxu0 0.0
    %130 = vmatpush.msra.mxu0 0.0
    %131 = vmatpush.msra.mxu0 0.0
    %132 = vmatpush.msra.mxu0 0.0
    %133 = vmatpush.msra.mxu0 0.0
    %134 = vmatpush.msra.mxu0 0.0
    %135 = vmatpush.msra.mxu0 0.0
    %136 = vmatpush.msra.mxu0 0.0
    %137 = vmatpush.msra.mxu0 0.0
    %138 = vmatpush.msra.mxu0 %v92
    %139 = vmatmul.f32.gmra.mxu0 %v76
    %v140 = vpop.f32.mrf.mxu0
    %v141 = vadd.f32 0.0, %v140
    %142 = vmatmul.f32.gmra.mxu0 %v79
    %v143 = vpop.f32.mrf.mxu0
    %v144 = vadd.f32 0.0, %v143
    %145 = vmatmul.f32.gmra.mxu0 %v82
    %v146 = vpop.f32.mrf.mxu0
    %v147 = vadd.f32 0.0, %v146
    %148 = vmatmul.f32.gmra.mxu0 %v85
    %v149 = vpop.f32.mrf.mxu0
    %v150 = vadd.f32 0.0, %v149
    %151 = vdwg.mxu0
    %v153 = vsel %vm74, %v52, 0
    %v156 = vsel %vm74, %v53, 0
    %v159 = vsel %vm74, %v54, 0
    %v162 = vsel %vm74, %v55, 0
    %v165 = vsel %vm87, %v50, 0
    %v168 = vsel %vm87, %v51, 0
    %170 = vmatpush.msra.mxu0 0.0
    %171 = vmatpush.msra.mxu0 0.0
    %172 = vmatpush.msra.mxu0 0.0
    %173 = vmatpush.msra.mxu0 0.0
    %174 = vmatpush.msra.mxu0 0.0
    %175 = vmatpush.msra.mxu0 0.0
    %176 = vmatpush.msra.mxu0 0.0
    %177 = vmatpush.msra.mxu0 0.0
    %178 = vmatpush.msra.mxu0 0.0
    %179 = vmatpush.msra.mxu0 0.0
    %180 = vmatpush.msra.mxu0 0.0
    %181 = vmatpush.msra.mxu0 0.0
    %182 = vmatpush.msra.mxu0 0.0
    %183 = vmatpush.msra.mxu0 0.0
    %184 = vmatpush.msra.mxu0 0.0
    %185 = vmatpush.msra.mxu0 %v165
    %186 = vmatmul.f32.gmra.mxu0 %v153
    %v187 = vpop.f32.mrf.mxu0
    %v188 = vadd.f32 %v112, %v187
    %189 = vmatmul.f32.gmra.mxu0 %v156
    %v190 = vpop.f32.mrf.mxu0
    %v191 = vadd.f32 %v115, %v190
    %192 = vmatmul.f32.gmra.mxu0 %v159
    %v193 = vpop.f32.mrf.mxu0
    %v194 = vadd.f32 %v118, %v193
    %195 = vmatmul.f32.gmra.mxu0 %v162
    %v196 = vpop.f32.mrf.mxu0
    %v197 = vadd.f32 %v121, %v196
    %198 = vdwg.mxu0
    %199 = vmatpush.msra.mxu0 0.0
    %200 = vmatpush.msra.mxu0 0.0
    %201 = vmatpush.msra.mxu0 0.0
    %202 = vmatpush.msra.mxu0 0.0
    %203 = vmatpush.msra.mxu0 0.0
    %204 = vmatpush.msra.mxu0 0.0
    %205 = vmatpush.msra.mxu0 0.0
    %206 = vmatpush.msra.mxu0 0.0
    %207 = vmatpush.msra.mxu0 0.0
    %208 = vmatpush.msra.mxu0 0.0
    %209 = vmatpush.msra.mxu0 0.0
    %210 = vmatpush.msra.mxu0 0.0
    %211 = vmatpush.msra.mxu0 0.0
    %212 = vmatpush.msra.mxu0 0.0
    %213 = vmatpush.msra.mxu0 0.0
    %214 = vmatpush.msra.mxu0 %v168
    %215 = vmatmul.f32.gmra.mxu0 %v153
    %v216 = vpop.f32.mrf.mxu0
    %v217 = vadd.f32 %v141, %v216
    %218 = vmatmul.f32.gmra.mxu0 %v156
    %v219 = vpop.f32.mrf.mxu0
    %v220 = vadd.f32 %v144, %v219
    %221 = vmatmul.f32.gmra.mxu0 %v159
    %v222 = vpop.f32.mrf.mxu0
    %v223 = vadd.f32 %v147, %v222
    %224 = vmatmul.f32.gmra.mxu0 %v162
    %v225 = vpop.f32.mrf.mxu0
    %v226 = vadd.f32 %v150, %v225
    %227 = vdwg.mxu0
    %s228 = scalar_lea.vmem %s1, 64
    %v229 = vld [vmem:[%s228] sm:$0xff]
    %v230 = vld [vmem:[%s228 + $0x8] sm:$0xff]
    %v231 = vld [vmem:[%s228 + $0x10] sm:$0xff]
    %v232 = vld [vmem:[%s228 + $0x18] sm:$0xff]
    %v234 = vsel %vm74, %v229, 0
    %v237 = vsel %vm74, %v230, 0
    %v240 = vsel %vm74, %v231, 0
    %v243 = vsel %vm74, %v232, 0
    %v246 = vsel %vm87, %v35, 0
    %v249 = vsel %vm87, %v36, 0
    %251 = vmatpush.msra.mxu0 0.0
    %252 = vmatpush.msra.mxu0 0.0
    %253 = vmatpush.msra.mxu0 0.0
    %254 = vmatpush.msra.mxu0 0.0
    %255 = vmatpush.msra.mxu0 0.0
    %256 = vmatpush.msra.mxu0 0.0
    %257 = vmatpush.msra.mxu0 0.0
    %258 = vmatpush.msra.mxu0 0.0
    %259 = vmatpush.msra.mxu0 0.0
    %260 = vmatpush.msra.mxu0 0.0
    %261 = vmatpush.msra.mxu0 0.0
    %262 = vmatpush.msra.mxu0 0.0
    %263 = vmatpush.msra.mxu0 0.0
    %264 = vmatpush.msra.mxu0 0.0
    %265 = vmatpush.msra.mxu0 0.0
    %266 = vmatpush.msra.mxu0 %v246
    %267 = vmatmul.f32.gmra.mxu0 %v234
    %v268 = vpop.f32.mrf.mxu0
    %v269 = vadd.f32 0.0, %v268
    %270 = vmatmul.f32.gmra.mxu0 %v237
    %v271 = vpop.f32.mrf.mxu0
    %v272 = vadd.f32 0.0, %v271
    %273 = vmatmul.f32.gmra.mxu0 %v240
    %v274 = vpop.f32.mrf.mxu0
    %v275 = vadd.f32 0.0, %v274
    %276 = vmatmul.f32.gmra.mxu0 %v243
    %v277 = vpop.f32.mrf.mxu0
    %v278 = vadd.f32 0.0, %v277
    %279 = vdwg.mxu0
    %280 = vmatpush.msra.mxu0 0.0
    %281 = vmatpush.msra.mxu0 0.0
    %282 = vmatpush.msra.mxu0 0.0
    %283 = vmatpush.msra.mxu0 0.0
    %284 = vmatpush.msra.mxu0 0.0
    %285 = vmatpush.msra.mxu0 0.0
    %286 = vmatpush.msra.mxu0 0.0
    %287 = vmatpush.msra.mxu0 0.0
    %288 = vmatpush.msra.mxu0 0.0
    %289 = vmatpush.msra.mxu0 0.0
    %290 = vmatpush.msra.mxu0 0.0
    %291 = vmatpush.msra.mxu0 0.0
    %292 = vmatpush.msra.mxu0 0.0
    %293 = vmatpush.msra.mxu0 0.0
    %294 = vmatpush.msra.mxu0 0.0
    %295 = vmatpush.msra.mxu0 %v249
    %296 = vmatmul.f32.gmra.mxu0 %v234
    %v297 = vpop.f32.mrf.mxu0
    %v298 = vadd.f32 0.0, %v297
    %299 = vmatmul.f32.gmra.mxu0 %v237
    %v300 = vpop.f32.mrf.mxu0
    %v301 = vadd.f32 0.0, %v300
    %302 = vmatmul.f32.gmra.mxu0 %v240
    %v303 = vpop.f32.mrf.mxu0
    %v304 = vadd.f32 0.0, %v303
    %305 = vmatmul.f32.gmra.mxu0 %v243
    %v306 = vpop.f32.mrf.mxu0
    %v307 = vadd.f32 0.0, %v306
    %308 = vdwg.mxu0
    %v309 = vadd.f32 %v188, %v269
    %v310 = vadd.f32 %v217, %v298
    %v311 = vadd.f32 %v191, %v272
    %v312 = vadd.f32 %v220, %v301
    %v313 = vadd.f32 %v194, %v275
    %v314 = vadd.f32 %v223, %v304
    %v315 = vadd.f32 %v197, %v278
    %v316 = vadd.f32 %v226, %v307
    %v317 = vld [vmem:[%s2] sm:$0xff]
    %v318 = vld [vmem:[%s2 + $0x8] sm:$0xff]
    %v319 = vld [vmem:[%s2 + $0x10] sm:$0xff]
    %v320 = vld [vmem:[%s2 + $0x18] sm:$0xff]
    %322 = vset.pattern.permute.xlu0 0
    %323 = vperm.xlu0 %322, %v317
    %v324 = vpop.permute.xlu0 %323
    %327 = vset.pattern.permute.xlu0 0
    %328 = vperm.xlu0 %327, %v318
    %v329 = vpop.permute.xlu0 %328
    %332 = vset.pattern.permute.xlu0 0
    %333 = vperm.xlu0 %332, %v319
    %v334 = vpop.permute.xlu0 %333
    %337 = vset.pattern.permute.xlu0 0
    %338 = vperm.xlu0 %337, %v320
    %v339 = vpop.permute.xlu0 %338
    %v341 = vadd.f32 %v309, %v324
    %v342 = vadd.f32 %v310, %v324
    %v343 = vadd.f32 %v311, %v329
    %v344 = vadd.f32 %v312, %v329
    %v345 = vadd.f32 %v313, %v334
    %v346 = vadd.f32 %v314, %v334
    %v347 = vadd.f32 %v315, %v339
    %v348 = vadd.f32 %v316, %v339
    %v349 = vxor.u32 %v345, 2147483648
    %v350 = vxor.u32 %v346, 2147483648
    %v351 = vxor.u32 %v347, 2147483648
    %v352 = vxor.u32 %v348, 2147483648
    %v353 = vmul.f32 %v349, 1.442695
    %v354 = vpow.pop %v353
    %v355 = vmul.f32 %v350, 1.442695
    %v356 = vpow.pop %v355
    %v357 = vmul.f32 %v351, 1.442695
    %v358 = vpow.pop %v357
    %v359 = vmul.f32 %v352, 1.442695
    %v360 = vpow.pop %v359
    %v361 = vadd.f32 %v354, 1.0
    %v362 = vadd.f32 %v356, 1.0
    %v363 = vadd.f32 %v358, 1.0
    %v364 = vadd.f32 %v360, 1.0
    %v365 = vrcp.pop %v361
    %v366 = vmul.f32 %v361, %v365
    %v367 = vsub.f32 1.0, %v366
    %v368 = vmul.f32 %v365, %v367
    %v369 = vadd.f32 %v365, %v368
    %vm370 = vweird.f32 %v361
    %vm371 = vweird.f32 %v365
    %vm372 = vmor %vm370, %vm371
    %v373 = vsel %vm372, %v365, %v369
    %v374 = vand.u32 2147483647, %v361
    %vm375 = vcmp.eq.f32.partialorder %v374, 8.507059e+37
    %v376 = vand.u32 %v361, 2147483648
    %v377 = vor.u32 1.1754944e-38, %v376
    %v378 = vsel %vm375, %v377, %v373
    %v379 = vmul.f32 1.0, %v378
    %v380 = vrcp.pop %v362
    %v381 = vmul.f32 %v362, %v380
    %v382 = vsub.f32 1.0, %v381
    %v383 = vmul.f32 %v380, %v382
    %v384 = vadd.f32 %v380, %v383
    %vm385 = vweird.f32 %v362
    %vm386 = vweird.f32 %v380
    %vm387 = vmor %vm385, %vm386
    %v388 = vsel %vm387, %v380, %v384
    %v389 = vand.u32 2147483647, %v362
    %vm390 = vcmp.eq.f32.partialorder %v389, 8.507059e+37
    %v391 = vand.u32 %v362, 2147483648
    %v392 = vor.u32 1.1754944e-38, %v391
    %v393 = vsel %vm390, %v392, %v388
    %v394 = vmul.f32 1.0, %v393
    %v395 = vrcp.pop %v363
    %v396 = vmul.f32 %v363, %v395
    %v397 = vsub.f32 1.0, %v396
    %v398 = vmul.f32 %v395, %v397
    %v399 = vadd.f32 %v395, %v398
    %vm400 = vweird.f32 %v363
    %vm401 = vweird.f32 %v395
    %vm402 = vmor %vm400, %vm401
    %v403 = vsel %vm402, %v395, %v399
    %v404 = vand.u32 2147483647, %v363
    %vm405 = vcmp.eq.f32.partialorder %v404, 8.507059e+37
    %v406 = vand.u32 %v363, 2147483648
    %v407 = vor.u32 1.1754944e-38, %v406
    %v408 = vsel %vm405, %v407, %v403
    %v409 = vmul.f32 1.0, %v408
    %v410 = vrcp.pop %v364
    %v411 = vmul.f32 %v364, %v410
    %v412 = vsub.f32 1.0, %v411
    %v413 = vmul.f32 %v410, %v412
    %v414 = vadd.f32 %v410, %v413
    %vm415 = vweird.f32 %v364
    %vm416 = vweird.f32 %v410
    %vm417 = vmor %vm415, %vm416
    %v418 = vsel %vm417, %v410, %v414
    %v419 = vand.u32 2147483647, %v364
    %vm420 = vcmp.eq.f32.partialorder %v419, 8.507059e+37
    %v421 = vand.u32 %v364, 2147483648
    %v422 = vor.u32 1.1754944e-38, %v421
    %v423 = vsel %vm420, %v422, %v418
    %v424 = vmul.f32 1.0, %v423
    %v425 = vmul.f32 %v341, %v379
    %v426 = vmul.f32 %v342, %v394
    %v427 = vmul.f32 %v343, %v409
    %v428 = vmul.f32 %v344, %v424
    %v429 = vlaneseq
    %v430 = vshrl.u32 %v429, 7
    %v431 = vadd.s32 %v430, 8
    %v432 = vadd.s32 %v430, 16
    %v433 = vadd.s32 %v430, 24
    %v434 = vadd.s32 %v430, 32
    %v435 = vadd.s32 %v430, 40
    %v436 = vadd.s32 %v430, 48
    %v437 = vadd.s32 %v430, 56
    %v438 = vadd.s32 %v430, 64
    %v439 = vadd.s32 %v430, 72
    %v440 = vadd.s32 %v430, 80
    %v441 = vadd.s32 %v430, 88
    %v442 = vadd.s32 %v430, 96
    %v443 = vadd.s32 %v430, 104
    %v444 = vadd.s32 %v430, 112
    %v445 = vadd.s32 %v430, 120
    %v446 = vadd.s32 %v430, 128
    %v447 = vadd.s32 %v430, 136
    %v448 = vadd.s32 %v430, 144
    %v449 = vadd.s32 %v430, 152
    %v450 = vadd.s32 %v430, 160
    %v451 = vadd.s32 %v430, 168
    %v452 = vadd.s32 %v430, 176
    %v453 = vadd.s32 %v430, 184
    %v454 = vadd.s32 %v430, 192
    %v455 = vadd.s32 %v430, 200
    %v456 = vadd.s32 %v430, 208
    %v457 = vadd.s32 %v430, 216
    %v458 = vadd.s32 %v430, 224
    %v459 = vadd.s32 %v430, 232
    %v460 = vadd.s32 %v430, 240
    %v461 = vadd.s32 %v430, 248
    %v462 = vmul.u32 %v38, 16
    %vm463 = vcmp.ge.s32.totalorder %v430, %v462
    %vm464 = vcmp.ge.s32.totalorder %v431, %v462
    %vm465 = vcmp.ge.s32.totalorder %v432, %v462
    %vm466 = vcmp.ge.s32.totalorder %v433, %v462
    %vm467 = vcmp.ge.s32.totalorder %v434, %v462
    %vm468 = vcmp.ge.s32.totalorder %v435, %v462
    %vm469 = vcmp.ge.s32.totalorder %v436, %v462
    %vm470 = vcmp.ge.s32.totalorder %v437, %v462
    %vm471 = vcmp.ge.s32.totalorder %v438, %v462
    %vm472 = vcmp.ge.s32.totalorder %v439, %v462
    %vm473 = vcmp.ge.s32.totalorder %v440, %v462
    %vm474 = vcmp.ge.s32.totalorder %v441, %v462
    %vm475 = vcmp.ge.s32.totalorder %v442, %v462
    %vm476 = vcmp.ge.s32.totalorder %v443, %v462
    %vm477 = vcmp.ge.s32.totalorder %v444, %v462
    %vm478 = vcmp.ge.s32.totalorder %v445, %v462
    %vm479 = vcmp.ge.s32.totalorder %v446, %v462
    %vm480 = vcmp.ge.s32.totalorder %v447, %v462
    %vm481 = vcmp.ge.s32.totalorder %v448, %v462
    %vm482 = vcmp.ge.s32.totalorder %v449, %v462
    %vm483 = vcmp.ge.s32.totalorder %v450, %v462
    %vm484 = vcmp.ge.s32.totalorder %v451, %v462
    %vm485 = vcmp.ge.s32.totalorder %v452, %v462
    %vm486 = vcmp.ge.s32.totalorder %v453, %v462
    %vm487 = vcmp.ge.s32.totalorder %v454, %v462
    %vm488 = vcmp.ge.s32.totalorder %v455, %v462
    %vm489 = vcmp.ge.s32.totalorder %v456, %v462
    %vm490 = vcmp.ge.s32.totalorder %v457, %v462
    %vm491 = vcmp.ge.s32.totalorder %v458, %v462
    %vm492 = vcmp.ge.s32.totalorder %v459, %v462
    %vm493 = vcmp.ge.s32.totalorder %v460, %v462
    %vm494 = vcmp.ge.s32.totalorder %v461, %v462
    %v495 = vadd.s32 %v462, 16
    %vm496 = vcmp.lt.s32.totalorder %v430, %v495
    %vm497 = vcmp.lt.s32.totalorder %v431, %v495
    %vm498 = vcmp.lt.s32.totalorder %v432, %v495
    %vm499 = vcmp.lt.s32.totalorder %v433, %v495
    %vm500 = vcmp.lt.s32.totalorder %v434, %v495
    %vm501 = vcmp.lt.s32.totalorder %v435, %v495
    %vm502 = vcmp.lt.s32.totalorder %v436, %v495
    %vm503 = vcmp.lt.s32.totalorder %v437, %v495
    %vm504 = vcmp.lt.s32.totalorder %v438, %v495
    %vm505 = vcmp.lt.s32.totalorder %v439, %v495
    %vm506 = vcmp.lt.s32.totalorder %v440, %v495
    %vm507 = vcmp.lt.s32.totalorder %v441, %v495
    %vm508 = vcmp.lt.s32.totalorder %v442, %v495
    %vm509 = vcmp.lt.s32.totalorder %v443, %v495
    %vm510 = vcmp.lt.s32.totalorder %v444, %v495
    %vm511 = vcmp.lt.s32.totalorder %v445, %v495
    %vm512 = vcmp.lt.s32.totalorder %v446, %v495
    %vm513 = vcmp.lt.s32.totalorder %v447, %v495
    %vm514 = vcmp.lt.s32.totalorder %v448, %v495
    %vm515 = vcmp.lt.s32.totalorder %v449, %v495
    %vm516 = vcmp.lt.s32.totalorder %v450, %v495
    %vm517 = vcmp.lt.s32.totalorder %v451, %v495
    %vm518 = vcmp.lt.s32.totalorder %v452, %v495
    %vm519 = vcmp.lt.s32.totalorder %v453, %v495
    %vm520 = vcmp.lt.s32.totalorder %v454, %v495
    %vm521 = vcmp.lt.s32.totalorder %v455, %v495
    %vm522 = vcmp.lt.s32.totalorder %v456, %v495
    %vm523 = vcmp.lt.s32.totalorder %v457, %v495
    %vm524 = vcmp.lt.s32.totalorder %v458, %v495
    %vm525 = vcmp.lt.s32.totalorder %v459, %v495
    %vm526 = vcmp.lt.s32.totalorder %v460, %v495
    %vm527 = vcmp.lt.s32.totalorder %v461, %v495
    %vm528 = vmand %vm463, %vm496
    %vm529 = vmand %vm464, %vm497
    %vm530 = vmand %vm465, %vm498
    %vm531 = vmand %vm466, %vm499
    %vm532 = vmand %vm467, %vm500
    %vm533 = vmand %vm468, %vm501
    %vm534 = vmand %vm469, %vm502
    %vm535 = vmand %vm470, %vm503
    %vm536 = vmand %vm471, %vm504
    %vm537 = vmand %vm472, %vm505
    %vm538 = vmand %vm473, %vm506
    %vm539 = vmand %vm474, %vm507
    %vm540 = vmand %vm475, %vm508
    %vm541 = vmand %vm476, %vm509
    %vm542 = vmand %vm477, %vm510
    %vm543 = vmand %vm478, %vm511
    %vm544 = vmand %vm479, %vm512
    %vm545 = vmand %vm480, %vm513
    %vm546 = vmand %vm481, %vm514
    %vm547 = vmand %vm482, %vm515
    %vm548 = vmand %vm483, %vm516
    %vm549 = vmand %vm484, %vm517
    %vm550 = vmand %vm485, %vm518
    %vm551 = vmand %vm486, %vm519
    %vm552 = vmand %vm487, %vm520
    %vm553 = vmand %vm488, %vm521
    %vm554 = vmand %vm489, %vm522
    %vm555 = vmand %vm490, %vm523
    %vm556 = vmand %vm491, %vm524
    %vm557 = vmand %vm492, %vm525
    %vm558 = vmand %vm493, %vm526
    %vm559 = vmand %vm494, %vm527
    %v560 = vsel %vm528, 1, 0
    %v561 = vsel %vm529, 1, 0
    %v562 = vsel %vm530, 1, 0
    %v563 = vsel %vm531, 1, 0
    %v564 = vsel %vm532, 1, 0
    %v565 = vsel %vm533, 1, 0
    %v566 = vsel %vm534, 1, 0
    %v567 = vsel %vm535, 1, 0
    %v568 = vsel %vm536, 1, 0
    %v569 = vsel %vm537, 1, 0
    %v570 = vsel %vm538, 1, 0
    %v571 = vsel %vm539, 1, 0
    %v572 = vsel %vm540, 1, 0
    %v573 = vsel %vm541, 1, 0
    %v574 = vsel %vm542, 1, 0
    %v575 = vsel %vm543, 1, 0
    %v576 = vsel %vm544, 1, 0
    %v577 = vsel %vm545, 1, 0
    %v578 = vsel %vm546, 1, 0
    %v579 = vsel %vm547, 1, 0
    %v580 = vsel %vm548, 1, 0
    %v581 = vsel %vm549, 1, 0
    %v582 = vsel %vm550, 1, 0
    %v583 = vsel %vm551, 1, 0
    %v584 = vsel %vm552, 1, 0
    %v585 = vsel %vm553, 1, 0
    %v586 = vsel %vm554, 1, 0
    %v587 = vsel %vm555, 1, 0
    %v588 = vsel %vm556, 1, 0
    %v589 = vsel %vm557, 1, 0
    %v590 = vsel %vm558, 1, 0
    %v591 = vsel %vm559, 1, 0
    %v592 = vcvt.s32.f32 %v560
    %v593 = vcvt.s32.f32 %v561
    %v594 = vcvt.s32.f32 %v562
    %v595 = vcvt.s32.f32 %v563
    %v596 = vcvt.s32.f32 %v564
    %v597 = vcvt.s32.f32 %v565
    %v598 = vcvt.s32.f32 %v566
    %v599 = vcvt.s32.f32 %v567
    %v600 = vcvt.s32.f32 %v568
    %v601 = vcvt.s32.f32 %v569
    %v602 = vcvt.s32.f32 %v570
    %v603 = vcvt.s32.f32 %v571
    %v604 = vcvt.s32.f32 %v572
    %v605 = vcvt.s32.f32 %v573
    %v606 = vcvt.s32.f32 %v574
    %v607 = vcvt.s32.f32 %v575
    %v608 = vcvt.s32.f32 %v576
    %v609 = vcvt.s32.f32 %v577
    %v610 = vcvt.s32.f32 %v578
    %v611 = vcvt.s32.f32 %v579
    %v612 = vcvt.s32.f32 %v580
    %v613 = vcvt.s32.f32 %v581
    %v614 = vcvt.s32.f32 %v582
    %v615 = vcvt.s32.f32 %v583
    %v616 = vcvt.s32.f32 %v584
    %v617 = vcvt.s32.f32 %v585
    %v618 = vcvt.s32.f32 %v586
    %v619 = vcvt.s32.f32 %v587
    %v620 = vcvt.s32.f32 %v588
    %v621 = vcvt.s32.f32 %v589
    %v622 = vcvt.s32.f32 %v590
    %v623 = vcvt.s32.f32 %v591
    %v624 = vmul.u32 %v430, 16
    %v625 = vmul.u32 %v431, 16
    %v626 = vadd.s32 %v38, 128
    %vm627 = vcmp.ge.s32.totalorder %v38, %v624
    %vm628 = vcmp.ge.s32.totalorder %v626, %v624
    %vm629 = vcmp.ge.s32.totalorder %v38, %v625
    %vm630 = vcmp.ge.s32.totalorder %v626, %v625
    %v631 = vadd.s32 %v624, 16
    %v632 = vadd.s32 %v625, 16
    %vm633 = vcmp.lt.s32.totalorder %v38, %v631
    %vm634 = vcmp.lt.s32.totalorder %v626, %v631
    %vm635 = vcmp.lt.s32.totalorder %v38, %v632
    %vm636 = vcmp.lt.s32.totalorder %v626, %v632
    %vm637 = vmand %vm627, %vm633
    %vm638 = vmand %vm628, %vm634
    %vm639 = vmand %vm629, %vm635
    %vm640 = vmand %vm630, %vm636
    %v641 = vsel %vm637, 1, 0
    %v642 = vsel %vm638, 1, 0
    %v643 = vsel %vm639, 1, 0
    %v644 = vsel %vm640, 1, 0
    %v645 = vcvt.s32.f32 %v641
    %v646 = vcvt.s32.f32 %v642
    %v647 = vcvt.s32.f32 %v643
    %v648 = vcvt.s32.f32 %v644
    %649 = vmatpush.msra.mxu0 %v607
    %650 = vmatpush.msra.mxu0 %v606
    %651 = vmatpush.msra.mxu0 %v605
    %652 = vmatpush.msra.mxu0 %v604
    %653 = vmatpush.msra.mxu0 %v603
    %654 = vmatpush.msra.mxu0 %v602
    %655 = vmatpush.msra.mxu0 %v601
    %656 = vmatpush.msra.mxu0 %v600
    %657 = vmatpush.msra.mxu0 %v599
    %658 = vmatpush.msra.mxu0 %v598
    %659 = vmatpush.msra.mxu0 %v597
    %660 = vmatpush.msra.mxu0 %v596
    %661 = vmatpush.msra.mxu0 %v595
    %662 = vmatpush.msra.mxu0 %v594
    %663 = vmatpush.msra.mxu0 %v593
    %664 = vmatpush.msra.mxu0 %v592
    %665 = vmatmul.f32.gmra.mxu0 %v425
    %v666 = vpop.f32.mrf.mxu0
    %v667 = vadd.f32 0.0, %v666
    %668 = vmatmul.f32.gmra.mxu0 %v427
    %v669 = vpop.f32.mrf.mxu0
    %v670 = vadd.f32 0.0, %v669
    %671 = vdwg.mxu0
    %672 = vmatpush.msra.mxu0 %v623
    %673 = vmatpush.msra.mxu0 %v622
    %674 = vmatpush.msra.mxu0 %v621
    %675 = vmatpush.msra.mxu0 %v620
    %676 = vmatpush.msra.mxu0 %v619
    %677 = vmatpush.msra.mxu0 %v618
    %678 = vmatpush.msra.mxu0 %v617
    %679 = vmatpush.msra.mxu0 %v616
    %680 = vmatpush.msra.mxu0 %v615
    %681 = vmatpush.msra.mxu0 %v614
    %682 = vmatpush.msra.mxu0 %v613
    %683 = vmatpush.msra.mxu0 %v612
    %684 = vmatpush.msra.mxu0 %v611
    %685 = vmatpush.msra.mxu0 %v610
    %686 = vmatpush.msra.mxu0 %v609
    %687 = vmatpush.msra.mxu0 %v608
    %688 = vmatmul.f32.gmra.mxu0 %v426
    %v689 = vpop.f32.mrf.mxu0
    %v690 = vadd.f32 %v667, %v689
    %691 = vmatmul.f32.gmra.mxu0 %v428
    %v692 = vpop.f32.mrf.mxu0
    %v693 = vadd.f32 %v670, %v692
    %694 = vdwg.mxu0
    %vm695 = vcmask 130048
    %v697 = vsel %vm695, 1.0, 0
    %699 = vmatpush.msra.mxu0 0.0
    %700 = vmatpush.msra.mxu0 0.0
    %701 = vmatpush.msra.mxu0 0.0
    %702 = vmatpush.msra.mxu0 0.0
    %703 = vmatpush.msra.mxu0 0.0
    %704 = vmatpush.msra.mxu0 0.0
    %705 = vmatpush.msra.mxu0 0.0
    %706 = vmatpush.msra.mxu0 0.0
    %707 = vmatpush.msra.mxu0 0.0
    %708 = vmatpush.msra.mxu0 0.0
    %709 = vmatpush.msra.mxu0 0.0
    %710 = vmatpush.msra.mxu0 0.0
    %711 = vmatpush.msra.mxu0 0.0
    %712 = vmatpush.msra.mxu0 0.0
    %713 = vmatpush.msra.mxu0 %v693
    %714 = vmatpush.msra.mxu0 %v690
    %715 = vmatmul.f32.gmra.mxu0 %v697
    %v716 = vpop.f32.mrf.mxu0
    %v717 = vadd.f32 0.0, %v716
    %718 = vmatmul.f32.gmra.mxu0 %v697
    %v719 = vpop.f32.mrf.mxu0
    %v720 = vadd.f32 0.0, %v719
    %721 = vdwg.mxu0
    %v722 = vmul.f32 %v717, 0.00390625
    %v723 = vmul.f32 %v720, 0.00390625
    %v725 = vsel %vm695, %v722, 0
    %v728 = vsel %vm695, %v723, 0
    %730 = vmatpush.msra.mxu0 0.0
    %731 = vmatpush.msra.mxu0 0.0
    %732 = vmatpush.msra.mxu0 0.0
    %733 = vmatpush.msra.mxu0 0.0
    %734 = vmatpush.msra.mxu0 0.0
    %735 = vmatpush.msra.mxu0 0.0
    %736 = vmatpush.msra.mxu0 0.0
    %737 = vmatpush.msra.mxu0 0.0
    %738 = vmatpush.msra.mxu0 0.0
    %739 = vmatpush.msra.mxu0 0.0
    %740 = vmatpush.msra.mxu0 0.0
    %741 = vmatpush.msra.mxu0 0.0
    %742 = vmatpush.msra.mxu0 0.0
    %743 = vmatpush.msra.mxu0 0.0
    %744 = vmatpush.msra.mxu0 %v647
    %745 = vmatpush.msra.mxu0 %v645
    %746 = vmatmul.f32.gmra.mxu0 %v725
    %v747 = vpop.f32.mrf.mxu0
    %v748 = vadd.f32 0.0, %v747
    %749 = vmatmul.f32.gmra.mxu0 %v728
    %v750 = vpop.f32.mrf.mxu0
    %v751 = vadd.f32 0.0, %v750
    %752 = vdwg.mxu0
    %753 = vmatpush.msra.mxu0 0.0
    %754 = vmatpush.msra.mxu0 0.0
    %755 = vmatpush.msra.mxu0 0.0
    %756 = vmatpush.msra.mxu0 0.0
    %757 = vmatpush.msra.mxu0 0.0
    %758 = vmatpush.msra.mxu0 0.0
    %759 = vmatpush.msra.mxu0 0.0
    %760 = vmatpush.msra.mxu0 0.0
    %761 = vmatpush.msra.mxu0 0.0
    %762 = vmatpush.msra.mxu0 0.0
    %763 = vmatpush.msra.mxu0 0.0
    %764 = vmatpush.msra.mxu0 0.0
    %765 = vmatpush.msra.mxu0 0.0
    %766 = vmatpush.msra.mxu0 0.0
    %767 = vmatpush.msra.mxu0 %v648
    %768 = vmatpush.msra.mxu0 %v646
    %769 = vmatmul.f32.gmra.mxu0 %v725
    %v770 = vpop.f32.mrf.mxu0
    %v771 = vadd.f32 0.0, %v770
    %772 = vmatmul.f32.gmra.mxu0 %v728
    %v773 = vpop.f32.mrf.mxu0
    %v774 = vadd.f32 0.0, %v773
    %775 = vdwg.mxu0
    %v776 = vsub.f32 %v425, %v748
    %v777 = vsub.f32 %v426, %v771
    %v778 = vsub.f32 %v427, %v751
    %v779 = vsub.f32 %v428, %v774
    %v780 = vmul.f32 %v776, %v776
    %v781 = vmul.f32 %v777, %v777
    %v782 = vmul.f32 %v778, %v778
    %v783 = vmul.f32 %v779, %v779
    %784 = vmatpush.msra.mxu0 %v607
    %785 = vmatpush.msra.mxu0 %v606
    %786 = vmatpush.msra.mxu0 %v605
    %787 = vmatpush.msra.mxu0 %v604
    %788 = vmatpush.msra.mxu0 %v603
    %789 = vmatpush.msra.mxu0 %v602
    %790 = vmatpush.msra.mxu0 %v601
    %791 = vmatpush.msra.mxu0 %v600
    %792 = vmatpush.msra.mxu0 %v599
    %793 = vmatpush.msra.mxu0 %v598
    %794 = vmatpush.msra.mxu0 %v597
    %795 = vmatpush.msra.mxu0 %v596
    %796 = vmatpush.msra.mxu0 %v595
    %797 = vmatpush.msra.mxu0 %v594
    %798 = vmatpush.msra.mxu0 %v593
    %799 = vmatpush.msra.mxu0 %v592
    %800 = vmatmul.f32.gmra.mxu0 %v780
    %v801 = vpop.f32.mrf.mxu0
    %v802 = vadd.f32 0.0, %v801
    %803 = vmatmul.f32.gmra.mxu0 %v782
    %v804 = vpop.f32.mrf.mxu0
    %v805 = vadd.f32 0.0, %v804
    %806 = vdwg.mxu0
    %807 = vmatpush.msra.mxu0 %v623
    %808 = vmatpush.msra.mxu0 %v622
    %809 = vmatpush.msra.mxu0 %v621
    %810 = vmatpush.msra.mxu0 %v620
    %811 = vmatpush.msra.mxu0 %v619
    %812 = vmatpush.msra.mxu0 %v618
    %813 = vmatpush.msra.mxu0 %v617
    %814 = vmatpush.msra.mxu0 %v616
    %815 = vmatpush.msra.mxu0 %v615
    %816 = vmatpush.msra.mxu0 %v614
    %817 = vmatpush.msra.mxu0 %v613
    %818 = vmatpush.msra.mxu0 %v612
    %819 = vmatpush.msra.mxu0 %v611
    %820 = vmatpush.msra.mxu0 %v610
    %821 = vmatpush.msra.mxu0 %v609
    %822 = vmatpush.msra.mxu0 %v608
    %823 = vmatmul.f32.gmra.mxu0 %v781
    %v824 = vpop.f32.mrf.mxu0
    %v825 = vadd.f32 %v802, %v824
    %826 = vmatmul.f32.gmra.mxu0 %v783
    %v827 = vpop.f32.mrf.mxu0
    %v828 = vadd.f32 %v805, %v827
    %829 = vdwg.mxu0
    %830 = vmatpush.msra.mxu0 0.0
    %831 = vmatpush.msra.mxu0 0.0
    %832 = vmatpush.msra.mxu0 0.0
    %833 = vmatpush.msra.mxu0 0.0
    %834 = vmatpush.msra.mxu0 0.0
    %835 = vmatpush.msra.mxu0 0.0
    %836 = vmatpush.msra.mxu0 0.0
    %837 = vmatpush.msra.mxu0 0.0
    %838 = vmatpush.msra.mxu0 0.0
    %839 = vmatpush.msra.mxu0 0.0
    %840 = vmatpush.msra.mxu0 0.0
    %841 = vmatpush.msra.mxu0 0.0
    %842 = vmatpush.msra.mxu0 0.0
    %843 = vmatpush.msra.mxu0 0.0
    %844 = vmatpush.msra.mxu0 %v828
    %845 = vmatpush.msra.mxu0 %v825
    %846 = vmatmul.f32.gmra.mxu0 %v697
    %v847 = vpop.f32.mrf.mxu0
    %v848 = vadd.f32 0.0, %v847
    %849 = vmatmul.f32.gmra.mxu0 %v697
    %v850 = vpop.f32.mrf.mxu0
    %v851 = vadd.f32 0.0, %v850
    %852 = vdwg.mxu0
    %v853 = vmul.f32 %v848, 0.00390625
    %v854 = vmul.f32 %v851, 0.00390625
    %v855 = vadd.f32 %v853, 1e-12
    %v856 = vadd.f32 %v854, 1e-12
    %v857 = vrsqrt.pop %v855
    %v858 = vmul.f32 %v857, %v855
    %v859 = vmul.f32 %v858, %v857
    %v860 = vmul.f32 0.5, %v859
    %v861 = vsub.f32 1.5, %v860
    %v862 = vmul.f32 %v857, %v861
    %vm863 = vweird.f32 %v855
    %vm864 = vweird.f32 %v857
    %vm865 = vmor %vm863, %vm864
    %v866 = vsel %vm865, %v857, %v862
    %v867 = vrsqrt.pop %v856
    %v868 = vmul.f32 %v867, %v856
    %v869 = vmul.f32 %v868, %v867
    %v870 = vmul.f32 0.5, %v869
    %v871 = vsub.f32 1.5, %v870
    %v872 = vmul.f32 %v867, %v871
    %vm873 = vweird.f32 %v856
    %vm874 = vweird.f32 %v867
    %vm875 = vmor %vm873, %vm874
    %v876 = vsel %vm875, %v867, %v872
    %v878 = vsel %vm695, %v866, 0
    %v881 = vsel %vm695, %v876, 0
    %883 = vmatpush.msra.mxu0 0.0
    %884 = vmatpush.msra.mxu0 0.0
    %885 = vmatpush.msra.mxu0 0.0
    %886 = vmatpush.msra.mxu0 0.0
    %887 = vmatpush.msra.mxu0 0.0
    %888 = vmatpush.msra.mxu0 0.0
    %889 = vmatpush.msra.mxu0 0.0
    %890 = vmatpush.msra.mxu0 0.0
    %891 = vmatpush.msra.mxu0 0.0
    %892 = vmatpush.msra.mxu0 0.0
    %893 = vmatpush.msra.mxu0 0.0
    %894 = vmatpush.msra.mxu0 0.0
    %895 = vmatpush.msra.mxu0 0.0
    %896 = vmatpush.msra.mxu0 0.0
    %897 = vmatpush.msra.mxu0 %v647
    %898 = vmatpush.msra.mxu0 %v645
    %899 = vmatmul.f32.gmra.mxu0 %v878
    %v900 = vpop.f32.mrf.mxu0
    %v901 = vadd.f32 0.0, %v900
    %902 = vmatmul.f32.gmra.mxu0 %v881
    %v903 = vpop.f32.mrf.mxu0
    %v904 = vadd.f32 0.0, %v903
    %905 = vdwg.mxu0
    %906 = vmatpush.msra.mxu0 0.0
    %907 = vmatpush.msra.mxu0 0.0
    %908 = vmatpush.msra.mxu0 0.0
    %909 = vmatpush.msra.mxu0 0.0
    %910 = vmatpush.msra.mxu0 0.0
    %911 = vmatpush.msra.mxu0 0.0
    %912 = vmatpush.msra.mxu0 0.0
    %913 = vmatpush.msra.mxu0 0.0
    %914 = vmatpush.msra.mxu0 0.0
    %915 = vmatpush.msra.mxu0 0.0
    %916 = vmatpush.msra.mxu0 0.0
    %917 = vmatpush.msra.mxu0 0.0
    %918 = vmatpush.msra.mxu0 0.0
    %919 = vmatpush.msra.mxu0 0.0
    %920 = vmatpush.msra.mxu0 %v648
    %921 = vmatpush.msra.mxu0 %v646
    %922 = vmatmul.f32.gmra.mxu0 %v878
    %v923 = vpop.f32.mrf.mxu0
    %v924 = vadd.f32 0.0, %v923
    %925 = vmatmul.f32.gmra.mxu0 %v881
    %v926 = vpop.f32.mrf.mxu0
    %v927 = vadd.f32 0.0, %v926
    %928 = vdwg.mxu0
    %v929 = vmul.f32 %v776, %v901
    %v930 = vmul.f32 %v777, %v924
    %v931 = vmul.f32 %v778, %v904
    %v932 = vmul.f32 %v779, %v927
    %v933 = vld [vmem:[%s3] sm:$0xff]
    %v934 = vld [vmem:[%s3 + $0x8] sm:$0xff]
    %v935 = vld [vmem:[%s3 + $0x10] sm:$0xff]
    %v936 = vld [vmem:[%s3 + $0x18] sm:$0xff]
    %v937 = vmul.f32 %v929, %v933
    %v938 = vmul.f32 %v930, %v934
    %v939 = vmul.f32 %v931, %v935
    %v940 = vmul.f32 %v932, %v936
    %v941 = vld [vmem:[%s4] sm:$0xff]
    %v942 = vld [vmem:[%s4 + $0x8] sm:$0xff]
    %v943 = vld [vmem:[%s4 + $0x10] sm:$0xff]
    %v944 = vld [vmem:[%s4 + $0x18] sm:$0xff]
    %v945 = vadd.f32 %v937, %v941
    %v946 = vadd.f32 %v938, %v942
    %v947 = vadd.f32 %v939, %v943
    %v948 = vadd.f32 %v940, %v944
    %v949 = vld [vmem:[%s5] sm:$0xff]
    %v950 = vld [vmem:[%s5 + $0x8] sm:$0xff]
    %v951 = vld [vmem:[%s6] sm:$0xff]
    %v952 = vld [vmem:[%s6 + $0x8] sm:$0xff]
    %954 = vset.pattern.permute.xlu0 0
    %955 = vperm.xlu0 %954, %v951
    %v956 = vpop.permute.xlu0 %955
    %959 = vset.pattern.permute.xlu0 0
    %960 = vperm.xlu0 %959, %v952
    %v961 = vpop.permute.xlu0 %960
    %v964 = vsel %vm695, %v949, 0
    %v967 = vsel %vm695, %v950, 0
    %969 = vmatpush.msra.mxu0 0.0
    %970 = vmatpush.msra.mxu0 0.0
    %971 = vmatpush.msra.mxu0 0.0
    %972 = vmatpush.msra.mxu0 0.0
    %973 = vmatpush.msra.mxu0 0.0
    %974 = vmatpush.msra.mxu0 0.0
    %975 = vmatpush.msra.mxu0 0.0
    %976 = vmatpush.msra.mxu0 0.0
    %977 = vmatpush.msra.mxu0 0.0
    %978 = vmatpush.msra.mxu0 0.0
    %979 = vmatpush.msra.mxu0 0.0
    %980 = vmatpush.msra.mxu0 0.0
    %981 = vmatpush.msra.mxu0 0.0
    %982 = vmatpush.msra.mxu0 0.0
    %983 = vmatpush.msra.mxu0 %v947
    %984 = vmatpush.msra.mxu0 %v945
    %985 = vmatmul.f32.gmra.mxu0 %v964
    %v986 = vpop.f32.mrf.mxu0
    %v987 = vadd.f32 %v956, %v986
    %988 = vmatmul.f32.gmra.mxu0 %v967
    %v989 = vpop.f32.mrf.mxu0
    %v990 = vadd.f32 %v961, %v989
    %991 = vdwg.mxu0
    %992 = vmatpush.msra.mxu0 0.0
    %993 = vmatpush.msra.mxu0 0.0
    %994 = vmatpush.msra.mxu0 0.0
    %995 = vmatpush.msra.mxu0 0.0
    %996 = vmatpush.msra.mxu0 0.0
    %997 = vmatpush.msra.mxu0 0.0
    %998 = vmatpush.msra.mxu0 0.0
    %999 = vmatpush.msra.mxu0 0.0
    %1000 = vmatpush.msra.mxu0 0.0
    %1001 = vmatpush.msra.mxu0 0.0
    %1002 = vmatpush.msra.mxu0 0.0
    %1003 = vmatpush.msra.mxu0 0.0
    %1004 = vmatpush.msra.mxu0 0.0
    %1005 = vmatpush.msra.mxu0 0.0
    %1006 = vmatpush.msra.mxu0 %v948
    %1007 = vmatpush.msra.mxu0 %v946
    %1008 = vmatmul.f32.gmra.mxu0 %v964
    %v1009 = vpop.f32.mrf.mxu0
    %v1010 = vadd.f32 %v956, %v1009
    %1011 = vmatmul.f32.gmra.mxu0 %v967
    %v1012 = vpop.f32.mrf.mxu0
    %v1013 = vadd.f32 %v961, %v1012
    %1014 = vdwg.mxu0
    %v1015 = vmax.f32 %v987, 0.0
    %v1016 = vmax.f32 %v1010, 0.0
    %v1017 = vmax.f32 %v990, 0.0
    %v1018 = vmax.f32 %v1013, 0.0
    %v1019 = vld [vmem:[%s7] sm:$0x1]
    %v1020 = vld [vmem:[#allocation2] sm:$0x1]
    %1022 = vset.pattern.permute.xlu0 0
    %1023 = vperm.xlu0 %1022, %v1020
    %v1024 = vpop.permute.xlu0 %1023
    %v1026 = vperm.slane %v1024, 0
    %v1028 = vsel %vm695, %v1019, 0
    %1030 = vmatpush.msra.mxu0 0.0
    %1031 = vmatpush.msra.mxu0 0.0
    %1032 = vmatpush.msra.mxu0 0.0
    %1033 = vmatpush.msra.mxu0 0.0
    %1034 = vmatpush.msra.mxu0 0.0
    %1035 = vmatpush.msra.mxu0 0.0
    %1036 = vmatpush.msra.mxu0 0.0
    %1037 = vmatpush.msra.mxu0 0.0
    %1038 = vmatpush.msra.mxu0 0.0
    %1039 = vmatpush.msra.mxu0 0.0
    %1040 = vmatpush.msra.mxu0 0.0
    %1041 = vmatpush.msra.mxu0 0.0
    %1042 = vmatpush.msra.mxu0 0.0
    %1043 = vmatpush.msra.mxu0 0.0
    %1044 = vmatpush.msra.mxu0 %v1017
    %1045 = vmatpush.msra.mxu0 %v1015
    %1046 = vmatmul.f32.gmra.mxu0 %v1028
    %v1047 = vpop.f32.mrf.mxu0
    %v1048 = vadd.f32 %v1026, %v1047
    %1049 = vdwg.mxu0
    %1050 = vmatpush.msra.mxu0 0.0
    %1051 = vmatpush.msra.mxu0 0.0
    %1052 = vmatpush.msra.mxu0 0.0
    %1053 = vmatpush.msra.mxu0 0.0
    %1054 = vmatpush.msra.mxu0 0.0
    %1055 = vmatpush.msra.mxu0 0.0
    %1056 = vmatpush.msra.mxu0 0.0
    %1057 = vmatpush.msra.mxu0 0.0
    %1058 = vmatpush.msra.mxu0 0.0
    %1059 = vmatpush.msra.mxu0 0.0
    %1060 = vmatpush.msra.mxu0 0.0
    %1061 = vmatpush.msra.mxu0 0.0
    %1062 = vmatpush.msra.mxu0 0.0
    %1063 = vmatpush.msra.mxu0 0.0
    %1064 = vmatpush.msra.mxu0 %v1018
    %1065 = vmatpush.msra.mxu0 %v1016
    %1066 = vmatmul.f32.gmra.mxu0 %v1028
    %v1067 = vpop.f32.mrf.mxu0
    %v1068 = vadd.f32 %v1026, %v1067
    %1069 = vdwg.mxu0
    %v1072 = vrot.slane %v1068, 7
    %vm1073 = vcmask 1040384
    %v1074 = vsel %vm1073, %v1048, %v1072
    %v1076 = vlaneseq
    %vm1077 = vcmp.ge.s32.totalorder %v1076, 0
    %vm1078 = vcmp.lt.s32.totalorder %v1076, 256
    %vm1079 = vmand %vm1077, %vm1078
    %1080 = vst.msk [vmem:[#allocation3] sm:$0x3] %vm1079, %v1074
    // Predicated region
    $region38: #{tpu_custom_call.1} parent=1 // pred_check
      _
    $region39: #{tpu_custom_call.1} parent=1 // pred_check_branch
      %1082 = sbr.rel (0) target = $region41
    $region40: #{tpu_custom_call.1} parent=1 // pred_region
      %1084 = vsyncadd [#allocation4], 0
      %s1086 = sshll.u32 [#allocation3], 4
      %s1087 = int_to_ptr.vmem [resolvable:$true] %s1086
      %s1088 = sshll.u32 %s9, 4
      %s1089 = int_to_ptr.hbm [resolvable:$true] %s1088
      %1091 = dma.vmem_to_hbm [thread:$0]  %s1087, 32, %s1089, [#allocation4]
    $region41: #{tpu_custom_call.1} parent=1 // pred_fallthru
      _
    // Predicated region
    $region42: #{tpu_custom_call.1} parent=1 // pred_check
      _
    $region43: #{tpu_custom_call.1} parent=1 // pred_check_branch
      %1093 = sbr.rel (0) target = $region45
    $region44: #{tpu_custom_call.1} parent=1 // pred_region
      %1095 = dma.done [#allocation4], 32
    $region45: #{tpu_custom_call.1} parent=1 // pred_fallthru
      _
    %1096 = vsyncpa [#allocation4], 1

</llo_original>
